<compile_context>
chip_gen: v5e
topology: v5e:2x2
jax: 0.10.0
libtpu: 0.0.40
codegen_flags: <defaults>
</compile_context>

<pallas_src>
import functools
import math

import jax
import jax.numpy as jnp
from jax.experimental import pallas as pl
from jax.experimental.pallas import tpu as pltpu


def _layernorm_kernel(x_ref, w_ref, b_ref, o_ref, *, eps, inv_n):
    x = x_ref[...]                                            # native dtype, in VMEM
    # Row mean with f32 accumulation (cast fuses into the reduction; no
    # tile-sized f32 temp of x is materialized).
    mean = jnp.sum(x, axis=-1, keepdims=True, dtype=jnp.float32) * inv_n
    # Two-pass variance, matching PyTorch: mean((x - mean)^2).  x is already in
    # VMEM so this second pass is VALU work only, not extra HBM traffic.
    xc = x.astype(jnp.float32) - mean                         # centered, f32
    var = jnp.sum(xc * xc, axis=-1, keepdims=True) * inv_n    # >= 0 by construction
    inv = jax.lax.rsqrt(var + eps)                            # EUP rsqrt
    # weight/bias arrive already f32 from the wrapper (resident (1, hidden) blocks).
    o_ref[...] = (xc * inv * w_ref[...] + b_ref[...]).astype(o_ref.dtype)


def _vmem_capacity_bytes():
    """Physical VMEM per core (128 MiB v5e/v6e, 64 MiB v7x); conservative fallback."""
    try:
        cap = int(pltpu.get_tpu_info().vmem_capacity_bytes)
        if cap > 0:
            return cap
    except Exception:
        pass
    return 64 * 1024 * 1024


def _pick_row_tile(rows, hidden, in_dtype, out_dtype, requested, vmem_cap):
    """Largest legal row tile that (a) respects sublane packing, (b) keeps the
    double-buffered i/o tiles *plus* f32 intermediates within a generation-aware
    VMEM budget, and (c) yields >= 2 grid steps when possible (v7x megacore)."""
    itemsize_in = jnp.dtype(in_dtype).itemsize
    itemsize_out = jnp.dtype(out_dtype).itemsize
    # sublane packing: 8 rows for 32-bit, 16 for 16-bit, 32 for 8-bit dtypes
    packing = max(1, 4 // max(1, min(itemsize_in, itemsize_out)))
    granule = 8 * packing

    # Budget ~1/4 of physical VMEM for the pipelined i/o tiles + intermediates
    # (32 MiB on v5e/v6e, 16 MiB on v7x); vmem_limit below gives 2x headroom.
    budget = vmem_cap // 4
    per_row = (2 * hidden * (itemsize_in + itemsize_out)   # double-buffered in + out
               + 3 * hidden * 4)                           # f32 centered x + transients
    max_rows_by_vmem = max(granule, budget // per_row)

    tile = min(int(requested), int(max_rows_by_vmem))
    if tile >= rows:
        # Would be a single grid step: split so both TensorCores get work (v7x).
        half = -(-rows // 2)
        tile = max(granule, -(-half // granule) * granule)
        if tile >= rows:
            return rows   # too few rows to split legally; full-extent block
        return tile
    return max(granule, (tile // granule) * granule)


def bert_layer_norm(x, weight, bias, eps=1e-12, *, row_tile=1024):
    """x: (..., hidden); weight, bias: (hidden,). Matches BertLayerNorm.forward."""
    orig_shape = x.shape
    hidden = orig_shape[-1]
    rows = math.prod(orig_shape[:-1]) if len(orig_shape) > 1 else 1

    x2 = x.reshape(rows, hidden)
    # Pre-cast params to f32 once on the host side; the (1, hidden) blocks are
    # resident (constant index_map) so the extra HBM cost is a few KiB total.
    w2 = weight.reshape(1, hidden).astype(jnp.float32)
    b2 = bias.reshape(1, hidden).astype(jnp.float32)

    vmem_cap = _vmem_capacity_bytes()
    tile = _pick_row_tile(rows, hidden, x.dtype, x.dtype, row_tile, vmem_cap)
    grid = (pl.cdiv(rows, tile),)   # ragged tail handled by masked writeback

    kernel = functools.partial(_layernorm_kernel, eps=float(eps), inv_n=1.0 / hidden)

    out = pl.pallas_call(
        kernel,
        out_shape=jax.ShapeDtypeStruct((rows, hidden), x.dtype),
        grid_spec=pltpu.PrefetchScalarGridSpec(
            num_scalar_prefetch=0,
            grid=grid,
            in_specs=[
                pl.BlockSpec((tile, hidden), lambda i: (i, 0)),
                pl.BlockSpec((1, hidden), lambda i: (0, 0)),   # weight: resident
                pl.BlockSpec((1, hidden), lambda i: (0, 0)),   # bias: resident
            ],
            out_specs=pl.BlockSpec((tile, hidden), lambda i: (i, 0)),
        ),
        compiler_params=pltpu.CompilerParams(
            dimension_semantics=("parallel",),        # megacore-shard the row axis
            vmem_limit_bytes=vmem_cap // 2,           # 64 MiB v5e/v6e, 32 MiB v7x
        ),
    )(x2, w2, b2)

    return out.reshape(orig_shape)


def _reference(x, weight, bias, eps):
    x = x.astype(jnp.float32)
    mean = jnp.mean(x, axis=-1, keepdims=True)
    var = jnp.mean((x - mean) ** 2, axis=-1, keepdims=True)
    return weight.astype(jnp.float32) * ((x - mean) / jnp.sqrt(var + eps)) + \
        bias.astype(jnp.float32)


if __name__ == "__main__":
    key = jax.random.PRNGKey(0)

    # Case 1: small shape consistent with the module (batch, seq, hidden).
    # rows=16 -> the tile picker splits it into 2 grid steps (megacore path).
    batch, seq, hidden = 2, 8, 32
    x = jax.random.normal(key, (batch, seq, hidden), dtype=jnp.float32)
    weight = jnp.ones((hidden,), dtype=jnp.float32)   # matches __init__
    bias = jnp.zeros((hidden,), dtype=jnp.float32)

    out = bert_layer_norm(x, weight, bias, eps=1e-12)
    out = jax.block_until_ready(out)
    ref = _reference(x, weight, bias, 1e-12)
    assert out.shape == x.shape
    assert jnp.allclose(out, ref, atol=1e-5, rtol=1e-5)

    # Case 2: ragged row count (rows=21 not a multiple of the row tile) to
    # exercise the masked-tail path.
    b2_, s2_, h2_ = 3, 7, 128
    x_r = jax.random.normal(jax.random.PRNGKey(1), (b2_, s2_, h2_), jnp.float32)
    w_r = jax.random.normal(jax.random.PRNGKey(2), (h2_,), jnp.float32)
    bias_r = jax.random.normal(jax.random.PRNGKey(3), (h2_,), jnp.float32)
    out_r = bert_layer_norm(x_r, w_r, bias_r, eps=1e-12, row_tile=8)
    out_r = jax.block_until_ready(out_r)
    ref_r = _reference(x_r, w_r, bias_r, 1e-12)
    assert out_r.shape == x_r.shape
    assert jnp.allclose(out_r, ref_r, atol=1e-5, rtol=1e-5)

    # Case 3: bf16 input to exercise the fused-cast / f32-accumulation path.
    x_h = jax.random.normal(jax.random.PRNGKey(4), (4, 8, 128), jnp.bfloat16)
    w_h = jnp.ones((128,), dtype=jnp.bfloat16)
    b_h = jnp.zeros((128,), dtype=jnp.bfloat16)
    out_h = bert_layer_norm(x_h, w_h, b_h, eps=1e-12)
    out_h = jax.block_until_ready(out_h)
    ref_h = _reference(x_h, w_h, b_h, 1e-12)
    assert out_h.shape == x_h.shape
    assert jnp.allclose(out_h.astype(jnp.float32), ref_h, atol=2e-2, rtol=2e-2)

    print("KERNEL_OK")
</pallas_src>

<mosaic_0001>
module attributes {stable_mosaic.version = 11 : i64} {
  func.func @_layernorm_kernel(%arg0: i32, %arg1: memref<8x32xf32, #tpu.memory_space<vmem>>, %arg2: memref<1x32xf32, #tpu.memory_space<vmem>>, %arg3: memref<1x32xf32, #tpu.memory_space<vmem>>, %arg4: memref<8x32xf32, #tpu.memory_space<vmem>>) attributes {dimension_semantics = [#tpu.dimension_semantics<parallel>], iteration_bounds = array<i64: 2>, scalar_prefetch = 0 : i64, scratch_operands = 0 : i64, tpu.core_type = #tpu.core_type<tc>, window_params = [{transform_indices = @transform_0, window_bounds = array<i64: 8, 32>}, {pipeline_mode = #tpu.pipeline_mode<synchronous>, transform_indices = @transform_1, window_bounds = array<i64: 1, 32>}, {pipeline_mode = #tpu.pipeline_mode<synchronous>, transform_indices = @transform_2, window_bounds = array<i64: 1, 32>}, {transform_indices = @transform_3, window_bounds = array<i64: 8, 32>}]} {
    %c0 = arith.constant 0 : index
    %c0_0 = arith.constant 0 : index
    %0 = vector.load %arg1[%c0, %c0_0] : memref<8x32xf32, #tpu.memory_space<vmem>>, vector<8x32xf32>
    %cst = arith.constant dense<0.000000e+00> : vector<8xf32>
    %1 = vector.multi_reduction <add>, %0, %cst [1] : vector<8x32xf32> to vector<8xf32>
    %2 = vector.shape_cast %1 : vector<8xf32> to vector<8x1xf32>
    %cst_1 = arith.constant 3.125000e-02 : f32
    %3 = vector.broadcast %cst_1 : f32 to vector<8x1xf32>
    %4 = arith.mulf %2, %3 : vector<8x1xf32>
    %5 = vector.broadcast %4 : vector<8x1xf32> to vector<8x32xf32>
    %6 = arith.subf %0, %5 : vector<8x32xf32>
    %7 = arith.mulf %6, %6 : vector<8x32xf32>
    %cst_2 = arith.constant dense<0.000000e+00> : vector<8xf32>
    %8 = vector.multi_reduction <add>, %7, %cst_2 [1] : vector<8x32xf32> to vector<8xf32>
    %9 = vector.shape_cast %8 : vector<8xf32> to vector<8x1xf32>
    %cst_3 = arith.constant 3.125000e-02 : f32
    %10 = vector.broadcast %cst_3 : f32 to vector<8x1xf32>
    %11 = arith.mulf %9, %10 : vector<8x1xf32>
    %cst_4 = arith.constant 9.99999996E-13 : f32
    %12 = vector.broadcast %cst_4 : f32 to vector<8x1xf32>
    %13 = arith.addf %11, %12 : vector<8x1xf32>
    %14 = math.rsqrt %13 : vector<8x1xf32>
    %15 = vector.broadcast %14 : vector<8x1xf32> to vector<8x32xf32>
    %16 = arith.mulf %6, %15 : vector<8x32xf32>
    %c0_5 = arith.constant 0 : index
    %c0_6 = arith.constant 0 : index
    %17 = vector.load %arg2[%c0_5, %c0_6] : memref<1x32xf32, #tpu.memory_space<vmem>>, vector<1x32xf32>
    %18 = vector.broadcast %17 : vector<1x32xf32> to vector<8x32xf32>
    %19 = arith.mulf %16, %18 : vector<8x32xf32>
    %c0_7 = arith.constant 0 : index
    %c0_8 = arith.constant 0 : index
    %20 = vector.load %arg3[%c0_7, %c0_8] : memref<1x32xf32, #tpu.memory_space<vmem>>, vector<1x32xf32>
    %21 = vector.broadcast %20 : vector<1x32xf32> to vector<8x32xf32>
    %22 = arith.addf %19, %21 : vector<8x32xf32>
    %c0_9 = arith.constant 0 : index
    %c0_10 = arith.constant 0 : index
    %23 = vector.load %arg4[%c0_9, %c0_10] : memref<8x32xf32, #tpu.memory_space<vmem>>, vector<8x32xf32>
    tpu.vector_store %arg4[%c0_9, %c0_10], %22 {strides = array<i32>} : memref<8x32xf32, #tpu.memory_space<vmem>>, vector<8x32xf32>,
    return
  }
  func.func @transform_0(%arg0: i32) -> (i32, i32) {
    %c0_i32 = arith.constant 0 : i32
    %c0_i32_0 = arith.constant 0 : i32
    return %arg0, %c0_i32 : i32, i32
  }
  func.func @transform_1(%arg0: i32) -> (i32, i32) {
    %c0_i32 = arith.constant 0 : i32
    %c0_i32_0 = arith.constant 0 : i32
    %c0_i32_1 = arith.constant 0 : i32
    return %c0_i32, %c0_i32_0 : i32, i32
  }
  func.func @transform_2(%arg0: i32) -> (i32, i32) {
    %c0_i32 = arith.constant 0 : i32
    %c0_i32_0 = arith.constant 0 : i32
    %c0_i32_1 = arith.constant 0 : i32
    return %c0_i32, %c0_i32_0 : i32, i32
  }
  func.func @transform_3(%arg0: i32) -> (i32, i32) {
    %c0_i32 = arith.constant 0 : i32
    %c0_i32_0 = arith.constant 0 : i32
    return %arg0, %c0_i32 : i32, i32
  }
}

</mosaic_0001>

<llo_original>
// kernel: tpu_custom_call.1
$region0: #{tpu_custom_call.1}
  #allocation0 [shape = 'u32[]', space=smem, size = 0x4, offset = 0x4, fixed_abs, tag = 'smem constant byte address 0x4 - core index']
  #allocation1 [shape = 'u32[72,128]{1,0:T(1,128)}', space=vmem, size = 0x9000, scoped, tag = 'internal scratch']
  %s0 = inlined_call_operand.hbm [shape: f32[16,32], index: 0, kind: input, shape index: {}]
  %s1 = inlined_call_operand.hbm [shape: f32[1,32], index: 1, kind: input, shape index: {}]
  %s2 = inlined_call_operand.vmem [shape: f32[1,32], index: 2, kind: input, shape index: {}]
  %s3 = inlined_call_operand.hbm [shape: f32[16,32], index: 3, kind: output, shape index: {}]
  %s4 = sld [smem:[#allocation0]]
  $region53: #{tpu_custom_call.1} parent=0
    _
  %s6 = ssub.s32 1, %s4
  %s7 = scalar_select 0, %s6, %s4
  $region1: #{tpu_custom_call.1} parent=0
    #allocation2 [shape = 'u8[8192]{0}', space=vmem, size = 0x2000, scoped, tag = 'input window, operand 0']
    #allocation3 [shape = 's32[2]{0}', space=sflag, size = 0x8, scoped, tag = 'scoped memory for tpu_custom_call.1']
    #allocation4 [shape = 's32[2]{0}', space=sflag, size = 0x8, scoped, tag = 'scoped memory for tpu_custom_call.1']
    #allocation5 [shape = 'u8[512]{0}', space=vmem, size = 0x400, scoped, tag = 'input window, operand 1, single buffered']
    #allocation6 [shape = 's32[1]{0}', space=sflag, size = 0x4, scoped, tag = 'scoped memory for tpu_custom_call.1']
    #allocation7 [shape = 'u8[8192]{0}', space=vmem, size = 0x2000, scoped, tag = 'output window, operand 0']
    %8 = vsyncpa [#allocation3], 0
    %s9 = scalar_lea.sflag [#allocation3], 1
    %10 = vsyncpa %s9, 0
    %11 = vsyncpa [#allocation6], 0
    %12 = vsyncpa [#allocation4], 0
    %s13 = scalar_lea.sflag [#allocation4], 1
    %14 = vsyncpa %s13, 0
    loop: start=0, step=1, limit=4
    $region2: #{tpu_custom_call.1} parent=1 // loop_pre_header
      _
    $region3: #{tpu_custom_call.1} parent=1 // loop_header
      %s16 = sphi 0, %s20
      %p17 = scmp.ge.s32.totalorder %s16, 4
      %s26 = sphi 0, %s28
      %s29 = sphi 0, %s26
      %s30 = sphi 0, %s29
      %s46 = sphi 0, %s30
      %s50 = sphi 0, %s50
      %s52 = sphi 0, %s50
      %s53 = sphi 0, %s52
      %s67 = sphi 0, %s53
      %s71 = sphi 0, %s71
      %s73 = sphi 0, %s71
      %s74 = sphi 0, %s73
      %s88 = sphi 0, %s74
      %s94 = sphi 0, %s96
      %s97 = sphi 0, %s94
      %s98 = sphi 0, %s97
      %s114 = sphi 0, %s98
    $region4: #{tpu_custom_call.1} parent=1 // loop_header_branch
      %19 = sbr.rel (%p17) target = $region8
    $region5: #{tpu_custom_call.1} parent=1 // loop_body
      %s21 = ssub.s32 %s16, 1
      %s22 = ssub.s32 %s16, 2
      %s23 = sadd.s32 %s16, 1
      %s24 = ssub.s32 %s16, %s23
      %p25 = scmp.eq.s32.totalorder %s24, 0
      %s27 = sadd.s32 %s26, 1
      %s28 = scalar_select %p25, %s26, %s27
      %p31 = pneg %p25
      %p32 = scmp.eq.s32.totalorder %s16, 1
      %p33 = por %p31, %p32
      %p34 = scmp.ne.s32.totalorder %s26, %s29
      %p35 = scmp.eq.s32.totalorder %s16, 0
      %p36 = por %p34, %p35
      %p37 = scmp.ne.s32.totalorder %s26, %s29
      %p38 = scmp.eq.s32.totalorder %s21, 1
      %p39 = por %p37, %p38
      %p40 = scmp.ne.s32.totalorder %s29, %s30
      %p41 = scmp.eq.s32.totalorder %s21, 0
      %p42 = por %p40, %p41
      %p43 = scmp.ne.s32.totalorder %s29, %s30
      %p44 = scmp.eq.s32.totalorder %s22, 1
      %p45 = por %p43, %p44
      %p47 = scmp.ne.s32.totalorder %s30, %s46
      %p48 = scmp.eq.s32.totalorder %s22, 0
      %p49 = por %p47, %p48
      %s51 = sadd.s32 %s50, 1
      %p54 = scmp.eq.s32.totalorder %s16, 1
      %p55 = scmp.ne.s32.totalorder %s50, %s52
      %p56 = scmp.eq.s32.totalorder %s16, 0
      %p57 = por %p55, %p56
      %p58 = scmp.ne.s32.totalorder %s50, %s52
      %p59 = scmp.eq.s32.totalorder %s21, 1
      %p60 = por %p58, %p59
      %p61 = scmp.ne.s32.totalorder %s52, %s53
      %p62 = scmp.eq.s32.totalorder %s21, 0
      %p63 = por %p61, %p62
      %p64 = scmp.ne.s32.totalorder %s52, %s53
      %p65 = scmp.eq.s32.totalorder %s22, 1
      %p66 = por %p64, %p65
      %p68 = scmp.ne.s32.totalorder %s53, %s67
      %p69 = scmp.eq.s32.totalorder %s22, 0
      %p70 = por %p68, %p69
      %s72 = sadd.s32 %s71, 1
      %p75 = scmp.eq.s32.totalorder %s16, 1
      %p76 = scmp.ne.s32.totalorder %s71, %s73
      %p77 = scmp.eq.s32.totalorder %s16, 0
      %p78 = por %p76, %p77
      %p79 = scmp.ne.s32.totalorder %s71, %s73
      %p80 = scmp.eq.s32.totalorder %s21, 1
      %p81 = por %p79, %p80
      %p82 = scmp.ne.s32.totalorder %s73, %s74
      %p83 = scmp.eq.s32.totalorder %s21, 0
      %p84 = por %p82, %p83
      %p85 = scmp.ne.s32.totalorder %s73, %s74
      %p86 = scmp.eq.s32.totalorder %s22, 1
      %p87 = por %p85, %p86
      %p89 = scmp.ne.s32.totalorder %s74, %s88
      %p90 = scmp.eq.s32.totalorder %s22, 0
      %p91 = por %p89, %p90
      %s92 = ssub.s32 %s16, %s23
      %p93 = scmp.eq.s32.totalorder %s92, 0
      %s95 = sadd.s32 %s94, 1
      %s96 = scalar_select %p93, %s94, %s95
      %p99 = pneg %p93
      %p100 = scmp.eq.s32.totalorder %s16, 1
      %p101 = por %p99, %p100
      %p102 = scmp.ne.s32.totalorder %s94, %s97
      %p103 = scmp.eq.s32.totalorder %s16, 0
      %p104 = por %p102, %p103
      %p105 = scmp.ne.s32.totalorder %s94, %s97
      %p106 = scmp.eq.s32.totalorder %s21, 1
      %p107 = por %p105, %p106
      %p108 = scmp.ne.s32.totalorder %s97, %s98
      %p109 = scmp.eq.s32.totalorder %s21, 0
      %p110 = por %p108, %p109
      %p111 = scmp.ne.s32.totalorder %s97, %s98
      %p112 = scmp.eq.s32.totalorder %s22, 1
      %p113 = por %p111, %p112
      %p115 = scmp.ne.s32.totalorder %s98, %s114
      %p116 = scmp.eq.s32.totalorder %s22, 0
      %p117 = por %p115, %p116
      %p118 = scmp.le.s32.totalorder 1, %s16
      %p119 = scmp.lt.s32.totalorder %s16, 3
      %p120 = pnand %p118, %p119
      %p121 = pneg %p120
      // Predicated region
      $region9: #{tpu_custom_call.1} parent=5 // pred_check
        _
      $region10: #{tpu_custom_call.1} parent=5 // pred_check_branch
        %123 = sbr.rel (%p120) target = $region12
      $region11: #{tpu_custom_call.1} parent=5 // pred_region
        %s124 = ssub.s32 %s16, 1
        // Predicated region
        $region13: #{tpu_custom_call.1} parent=11 // pred_check
          %p125 = pneg %p63
        $region14: #{tpu_custom_call.1} parent=11 // pred_check_branch
          %127 = sbr.rel (%p125) target = $region16
        $region15: #{tpu_custom_call.1} parent=11 // pred_region
          %129 = vsyncadd [#allocation6], 0
          %s131 = sshll.u32 %s1, 4
          %s132 = int_to_ptr.hbm [resolvable:$true] %s131
          %s133 = sshll.u32 [#allocation5], 4
          %s134 = int_to_ptr.vmem [resolvable:$true] %s133
          %136 = dma.hbm_to_vmem [thread:$0]  %s132, 16, %s134, [#allocation6]
        $region16: #{tpu_custom_call.1} parent=11 // pred_fallthru
          _
        // Predicated region
        $region17: #{tpu_custom_call.1} parent=11 // pred_check
          %p137 = pneg %p84
        $region18: #{tpu_custom_call.1} parent=11 // pred_check_branch
          %139 = sbr.rel (%p137) target = $region20
        $region19: #{tpu_custom_call.1} parent=11 // pred_region
          _
        $region20: #{tpu_custom_call.1} parent=11 // pred_fallthru
          _
      $region12: #{tpu_custom_call.1} parent=5 // pred_fallthru
        _
      %p140 = scmp.lt.s32.totalorder %s16, 2
      // Predicated region
      $region21: #{tpu_custom_call.1} parent=5 // pred_check
        %p141 = pneg %p140
      $region22: #{tpu_custom_call.1} parent=5 // pred_check_branch
        %143 = sbr.rel (%p141) target = $region24
      $region23: #{tpu_custom_call.1} parent=5 // pred_region
        // Predicated region
        $region25: #{tpu_custom_call.1} parent=23 // pred_check
          %p144 = pneg %p36
        $region26: #{tpu_custom_call.1} parent=23 // pred_check_branch
          %146 = sbr.rel (%p144) target = $region28
        $region27: #{tpu_custom_call.1} parent=23 // pred_region
          %s147 = sand.u32 %s26, 1
          %s148 = scalar_lea.sflag [#allocation3], %s147
          %s149 = sand.u32 %s26, 1
          %s150 = smul.addr %s149, 8
          %s151 = scalar_lea.vmem [#allocation2], %s150
          %153 = vsyncadd %s148, 0
          %s154 = smul.addr %s16, 8
          %s155 = scalar_lea.hbm %s0, %s154
          %s157 = sshll.u32 %s155, 4
          %s158 = int_to_ptr.hbm [resolvable:$true] %s157
          %s159 = sshll.u32 %s151, 4
          %s160 = int_to_ptr.vmem [resolvable:$true] %s159
          %162 = dma.hbm_to_vmem [thread:$0]  %s158, 128, %s160, %s148
        $region28: #{tpu_custom_call.1} parent=23 // pred_fallthru
          _
      $region24: #{tpu_custom_call.1} parent=5 // pred_fallthru
        _
      %p163 = scmp.le.s32.totalorder 1, %s16
      %p164 = scmp.lt.s32.totalorder %s16, 3
      %p165 = pnand %p163, %p164
      %p166 = pneg %p165
      // Predicated region
      $region29: #{tpu_custom_call.1} parent=5 // pred_check
        _
      $region30: #{tpu_custom_call.1} parent=5 // pred_check_branch
        %168 = sbr.rel (%p165) target = $region32
      $region31: #{tpu_custom_call.1} parent=5 // pred_region
        %s169 = ssub.s32 %s16, 1
        %s170 = sand.u32 %s29, 1
        %s171 = scalar_lea.sflag [#allocation3], %s170
        %s172 = sand.u32 %s29, 1
        %s173 = smul.addr %s172, 8
        %s174 = scalar_lea.vmem [#allocation2], %s173
        // Predicated region
        $region33: #{tpu_custom_call.1} parent=31 // pred_check
          %p175 = pneg %p42
        $region34: #{tpu_custom_call.1} parent=31 // pred_check_branch
          %177 = sbr.rel (%p175) target = $region36
        $region35: #{tpu_custom_call.1} parent=31 // pred_region
          %179 = dma.done %s171, 128
        $region36: #{tpu_custom_call.1} parent=31 // pred_fallthru
          _
        // Predicated region
        $region37: #{tpu_custom_call.1} parent=31 // pred_check
          %p180 = pneg %p63
        $region38: #{tpu_custom_call.1} parent=31 // pred_check_branch
          %182 = sbr.rel (%p180) target = $region40
        $region39: #{tpu_custom_call.1} parent=31 // pred_region
          %184 = dma.done [#allocation6], 16
        $region40: #{tpu_custom_call.1} parent=31 // pred_fallthru
          _
        %s185 = sand.u32 %s29, 1
        %s186 = scalar_lea.sflag [#allocation3], %s185
        %s187 = sand.u32 %s29, 1
        %s188 = smul.addr %s187, 8
        %s189 = scalar_lea.vmem [#allocation2], %s188
        %p190 = pneg %p42
        %p191 = pneg %p39
        %p192 = pneg %p63
        %p193 = pneg %p60
        %p194 = pneg %p84
        %p195 = pneg %p81
        %p196 = pneg %p110
        %p197 = pneg %p107
        %s198 = sand.u32 %s97, 1
        %s199 = scalar_lea.sflag [#allocation4], %s198
        %s200 = sand.u32 %s97, 1
        %s201 = smul.addr %s200, 8
        %s202 = scalar_lea.vmem [#allocation7], %s201
        %v203 = vld [vmem:[%s174] sm:$0xff]
        %vm204 = vcmask 261120
        %v205 = vsel %vm204, %v203, 0.0
        %206 = vadd.xlane.f32.xlu0 %v205
        %v207 = vpop.xlane.xlu0 %206
        %v208 = vmul.f32 %v207, 0.03125
        %v209 = vsub.f32 %v203, %v208
        %v210 = vmul.f32 %v209, %v209
        %v211 = vsel %vm204, %v210, 0.0
        %212 = vadd.xlane.f32.xlu0 %v211
        %v213 = vpop.xlane.xlu0 %212
        %v214 = vmul.f32 %v213, 0.03125
        %v215 = vadd.f32 %v214, 1e-12
        %v216 = vrsqrt.pop %v215
        %v217 = vmul.f32 %v216, %v215
        %v218 = vmul.f32 %v217, %v216
        %v219 = vmul.f32 0.5, %v218
        %v220 = vsub.f32 1.5, %v219
        %v221 = vmul.f32 %v216, %v220
        %vm222 = vweird.f32 %v215
        %vm223 = vweird.f32 %v216
        %vm224 = vmor %vm222, %vm223
        %v225 = vsel %vm224, %v216, %v221
        %v226 = vmul.f32 %v209, %v225
        %v227 = vld [vmem:[#allocation5] sm:$0x1]
        %v229 = vperm.slane %v227, 0
        %v231 = vmul.f32 %v226, %v229
        %v232 = vld [vmem:[%s2] sm:$0x1]
        %v234 = vperm.slane %v232, 0
        %v236 = vadd.f32 %v231, %v234
        %237 = vst.msk [vmem:[%s202] sm:$0xff] %vm204, %v236
        %s238 = sand.u32 %s97, 1
        %s239 = scalar_lea.sflag [#allocation4], %s238
        %s240 = sand.u32 %s97, 1
        %s241 = smul.addr %s240, 8
        %s242 = scalar_lea.vmem [#allocation7], %s241
        // Predicated region
        $region41: #{tpu_custom_call.1} parent=31 // pred_check
          %p243 = pneg %p107
        $region42: #{tpu_custom_call.1} parent=31 // pred_check_branch
          %245 = sbr.rel (%p243) target = $region44
        $region43: #{tpu_custom_call.1} parent=31 // pred_region
          %247 = vsyncadd %s239, 0
          %s248 = smul.addr %s21, 8
          %s249 = scalar_lea.hbm %s3, %s248
          %s251 = sshll.u32 %s242, 4
          %s252 = int_to_ptr.vmem [resolvable:$true] %s251
          %s253 = sshll.u32 %s249, 4
          %s254 = int_to_ptr.hbm [resolvable:$true] %s253
          %256 = dma.vmem_to_hbm [thread:$0]  %s252, 128, %s254, %s239
        $region44: #{tpu_custom_call.1} parent=31 // pred_fallthru
          _
      $region32: #{tpu_custom_call.1} parent=5 // pred_fallthru
        _
      %p257 = scmp.le.s32.totalorder 2, %s16
      // Predicated region
      $region45: #{tpu_custom_call.1} parent=5 // pred_check
        %p258 = pneg %p257
      $region46: #{tpu_custom_call.1} parent=5 // pred_check_branch
        %260 = sbr.rel (%p258) target = $region48
      $region47: #{tpu_custom_call.1} parent=5 // pred_region
        %s261 = ssub.s32 %s16, 2
        // Predicated region
        $region49: #{tpu_custom_call.1} parent=47 // pred_check
          %p262 = pneg %p113
        $region50: #{tpu_custom_call.1} parent=47 // pred_check_branch
          %264 = sbr.rel (%p262) target = $region52
        $region51: #{tpu_custom_call.1} parent=47 // pred_region
          %s265 = sand.u32 %s98, 1
          %s266 = scalar_lea.sflag [#allocation4], %s265
          %s267 = sand.u32 %s98, 1
          %s268 = smul.addr %s267, 8
          %s269 = scalar_lea.vmem [#allocation7], %s268
          %271 = dma.done %s266, 128
        $region52: #{tpu_custom_call.1} parent=47 // pred_fallthru
          _
      $region48: #{tpu_custom_call.1} parent=5 // pred_fallthru
        _
    $region6: #{tpu_custom_call.1} parent=1 // loop_footer
      %s20 = sadd.s32 1, %s16
    $region7: #{tpu_custom_call.1} parent=1 // loop_footer_branch
      %15 = sbr.rel target = $region3
    $region8: #{tpu_custom_call.1} parent=1 // loop_exit
      _
    %272 = vsyncpa [#allocation3], 1
    %s273 = scalar_lea.sflag [#allocation3], 1
    %274 = vsyncpa %s273, 1
    %275 = vsyncpa [#allocation6], 1
    %276 = vsyncpa [#allocation4], 1
    %s277 = scalar_lea.sflag [#allocation4], 1
    %278 = vsyncpa %s277, 1

</llo_original>
